<compile_context>
chip_gen: v7x
topology: tpu7x:2x2x1
jax: 0.10.0
libtpu: 0.0.40
codegen_flags: <defaults>
</compile_context>

<pallas_src>
import functools

import jax
import jax.numpy as jnp
from jax.experimental import pallas as pl
from jax.experimental.pallas import tpu as pltpu


def _label_smoothing_kernel(pred_ref, labels_ref, out_ref, *,
                            smoothing, classes, batch, block_rows,
                            need_mask, labels_resident):
    i = pl.program_id(0)
    tb, n_cls = pred_ref.shape

    # log-softmax in f32 (inputs may be bf16 / f32).
    z = pred_ref[...].astype(jnp.float32)                         # (tb, C)
    m = jnp.max(z, axis=-1, keepdims=True)
    zs = z - m
    lse = jnp.log(jnp.sum(jnp.exp(zs), axis=-1, keepdims=True))
    logp = zs - lse                                               # (tb, C)

    conf = jnp.float32(1.0 - smoothing)
    eps = jnp.float32(smoothing / (classes - 1) if classes > 1 else 0.0)

    if labels_resident:
        start = pl.multiple_of(i * block_rows, block_rows)
        labels = labels_ref[pl.ds(start, block_rows), :]          # (tb, 1)
    else:
        labels = labels_ref[...]                                  # (tb, 1)

    # Fused smoothed-CE weights: conf at the target column, eps elsewhere.
    col = jax.lax.broadcasted_iota(jnp.int32, (tb, n_cls), 1)
    w = jnp.where(col == labels, conf, eps)                       # (tb, C) f32
    contrib = w * logp                                            # (tb, C)

    if need_mask:
        # Mask rows past the true batch (last, partially out-of-range block).
        row = jax.lax.broadcasted_iota(jnp.int32, (tb, 1), 0)
        valid = (i * block_rows + row) < batch                    # (tb, 1)
        contrib = jnp.where(valid, contrib, jnp.float32(0.0))

    tile_loss = -jnp.sum(contrib)
    # Lane-dense, unmasked store of this block's partial sum.
    out_ref[...] = jnp.full(out_ref.shape, tile_loss, dtype=jnp.float32)


def _vmem_request_cap():
    """Per-generation cap on the scoped-VMEM request."""
    phys = 128 << 20
    try:
        phys = int(pltpu.get_tpu_info().vmem_capacity_bytes)
    except Exception:
        pass
    # ~48 MiB on 64 MiB parts (v7x), ~96-100 MiB on 128 MiB parts (v5e/v6e).
    return int(min(max(phys * 3 // 4, 16 << 20), 100 << 20))


def _pick_block_rows(batch, n_classes, itemsize, vmem_cap):
    """Rows per tile from a VMEM byte budget (input dbl-buffer + f32 temps)."""
    sublane = 16 if itemsize < 4 else 8
    target_tile_bytes = 4 << 20                     # ~4 MiB pred buffer
    # 2x double-buffered native-dtype input + ~5 live f32 (tb, C) temporaries.
    per_row_bytes = 2 * n_classes * itemsize + 20 * n_classes
    rows_by_tile = max(target_tile_bytes // max(n_classes * itemsize, 1), 1)
    rows_by_vmem = max(int(vmem_cap * 0.6) // max(per_row_bytes, 1), 1)
    batch_ceil = -(-batch // sublane) * sublane
    rows = min(rows_by_tile, rows_by_vmem, batch_ceil, 4096)
    rows = max((rows // sublane) * sublane, sublane)
    return int(rows)


def label_smoothing_loss(pred, target, *, smoothing=0.0, classes=None,
                         block_rows=None):
    """Pallas implementation of LabelSmoothingLoss.forward (returns a scalar)."""
    B, C = pred.shape
    if classes is None:
        classes = C
    itemsize = jnp.dtype(pred.dtype).itemsize
    sublane = 16 if itemsize < 4 else 8
    vmem_cap = _vmem_request_cap()

    if block_rows is None:
        block_rows = _pick_block_rows(B, C, itemsize, vmem_cap)
    else:
        block_rows = max(((int(block_rows) + sublane - 1) // sublane) * sublane,
                         sublane)

    num_blocks = -(-B // block_rows)
    b_pad = num_blocks * block_rows
    need_mask = (b_pad != B)

    labels2d = target.astype(jnp.int32).reshape(B, 1)
    if b_pad != B:
        labels2d = jnp.pad(labels2d, ((0, b_pad - B), (0, 0)))

    # Keep the (tiny) labels array VMEM-resident unless the batch is huge.
    labels_resident = b_pad <= 4096
    if labels_resident:
        labels_spec = pl.BlockSpec((b_pad, 1), lambda i: (0, 0))
    else:
        labels_spec = pl.BlockSpec((block_rows, 1), lambda i: (i, 0))

    # VMEM budget: double-buffered pred tile + f32 temporaries + labels + out.
    pred_tile_bytes = block_rows * C * itemsize
    f32_temp_bytes = 5 * block_rows * C * 4
    labels_bytes = (b_pad if labels_resident else block_rows) * 128 * 4
    out_bytes = 2 * 8 * 128 * 4
    vmem_need = 2 * pred_tile_bytes + f32_temp_bytes + labels_bytes + out_bytes \
        + (2 << 20)
    vmem_limit = int(min(max(vmem_need, 16 << 20), vmem_cap))

    kernel = functools.partial(
        _label_smoothing_kernel,
        smoothing=float(smoothing), classes=int(classes), batch=int(B),
        block_rows=int(block_rows), need_mask=bool(need_mask),
        labels_resident=bool(labels_resident))

    partials = pl.pallas_call(
        kernel,
        out_shape=jax.ShapeDtypeStruct((num_blocks, 8, 128), jnp.float32),
        grid=(num_blocks,),
        in_specs=[
            pl.BlockSpec((block_rows, C), lambda i: (i, 0)),   # pred tile
            labels_spec,                                       # labels
        ],
        out_specs=pl.BlockSpec((1, 8, 128), lambda i: (i, 0, 0)),
        compiler_params=pltpu.CompilerParams(
            dimension_semantics=("parallel",),
            vmem_limit_bytes=vmem_limit),
    )(pred, labels2d)

    # Per-block partial sums -> tree-sum + mean in the wrapper.
    return jnp.sum(partials[:, 0, 0]) / B


def _reference_loss(pred, target, *, smoothing=0.0, classes=None):
    B, C = pred.shape
    if classes is None:
        classes = C
    conf = 1.0 - smoothing
    eps = smoothing / (classes - 1) if classes > 1 else 0.0
    logp = jax.nn.log_softmax(pred.astype(jnp.float32), axis=-1)
    true_dist = jnp.full((B, C), eps, dtype=jnp.float32)
    true_dist = true_dist.at[jnp.arange(B), target].set(conf)
    return jnp.mean(jnp.sum(-true_dist * logp, axis=-1))


if __name__ == "__main__":
    key = jax.random.PRNGKey(0)
    kp, kt = jax.random.split(key)

    cases = [
        dict(B=32, C=128, dtype=jnp.float32, smoothing=0.1, block_rows=None),
        dict(B=32, C=128, dtype=jnp.float32, smoothing=0.0, block_rows=None),
        dict(B=32, C=128, dtype=jnp.bfloat16, smoothing=0.1, block_rows=None),
        # non-divisible batch: exercises the in-kernel row mask
        dict(B=20, C=128, dtype=jnp.float32, smoothing=0.1, block_rows=16),
    ]

    ok = True
    for cfg in cases:
        B, C = cfg["B"], cfg["C"]
        pred = jax.random.normal(kp, (B, C), dtype=jnp.float32).astype(cfg["dtype"])
        target = jax.random.randint(kt, (B,), 0, C, dtype=jnp.int32)

        loss = jax.block_until_ready(label_smoothing_loss(
            pred, target, smoothing=cfg["smoothing"],
            block_rows=cfg["block_rows"]))
        ref = jax.block_until_ready(_reference_loss(
            pred, target, smoothing=cfg["smoothing"]))

        tol = 1e-4 + 1e-4 * abs(float(ref))
        if not (bool(jnp.isfinite(loss)) and abs(float(loss) - float(ref)) < tol):
            ok = False
            print(f"MISMATCH B={B} C={C} dtype={cfg['dtype'].__name__} "
                  f"smoothing={cfg['smoothing']}: pallas={float(loss)} "
                  f"ref={float(ref)}")

    if ok:
        print("KERNEL_OK")
</pallas_src>

<mosaic_0001>
module attributes {stable_mosaic.version = 11 : i64} {
  func.func @_label_smoothing_kernel(%arg0: i32, %arg1: memref<32x128xf32, #tpu.memory_space<vmem>>, %arg2: memref<32x1xi32, #tpu.memory_space<vmem>>, %arg3: memref<1x8x128xf32, #tpu.memory_space<vmem>>) attributes {dimension_semantics = [#tpu.dimension_semantics<parallel>], iteration_bounds = array<i64: 1>, scalar_prefetch = 0 : i64, scratch_operands = 0 : i64, tpu.core_type = #tpu.core_type<tc>, window_params = [{transform_indices = @transform_0, window_bounds = array<i64: 32, 128>}, {pipeline_mode = #tpu.pipeline_mode<synchronous>, transform_indices = @transform_1, window_bounds = array<i64: 32, 1>}, {transform_indices = @transform_2, window_bounds = array<i64: 1, 8, 128>}]} {
    %c0 = arith.constant 0 : index
    %c0_0 = arith.constant 0 : index
    %0 = vector.load %arg1[%c0, %c0_0] : memref<32x128xf32, #tpu.memory_space<vmem>>, vector<32x128xf32>
    %cst = arith.constant dense<0xFF800000> : vector<32xf32>
    %1 = vector.multi_reduction <maximumf>, %0, %cst [1] : vector<32x128xf32> to vector<32xf32>
    %2 = vector.shape_cast %1 : vector<32xf32> to vector<32x1xf32>
    %3 = vector.broadcast %2 : vector<32x1xf32> to vector<32x128xf32>
    %4 = arith.subf %0, %3 : vector<32x128xf32>
    %5 = math.exp %4 : vector<32x128xf32>
    %cst_1 = arith.constant dense<0.000000e+00> : vector<32xf32>
    %6 = vector.multi_reduction <add>, %5, %cst_1 [1] : vector<32x128xf32> to vector<32xf32>
    %7 = vector.shape_cast %6 : vector<32xf32> to vector<32x1xf32>
    %8 = math.log %7 : vector<32x1xf32>
    %9 = vector.broadcast %8 : vector<32x1xf32> to vector<32x128xf32>
    %10 = arith.subf %4, %9 : vector<32x128xf32>
    %c32_i32 = arith.constant 32 : i32
    %11 = arith.muli %arg0, %c32_i32 : i32
    %12 = tpu.assume_multiple %11, 32 : i32
    %13 = arith.index_cast %12 : i32 to index
    %c0_2 = arith.constant 0 : index
    %14 = vector.load %arg2[%13, %c0_2] : memref<32x1xi32, #tpu.memory_space<vmem>>, vector<32x1xi32>
    %15 = tpu.iota {dimensions = array<i32: 1>} : vector<32x128xi32>
    %16 = vector.broadcast %14 : vector<32x1xi32> to vector<32x128xi32>
    %17 = arith.cmpi eq, %15, %16 : vector<32x128xi32>
    %cst_3 = arith.constant 0.899999976 : f32
    %cst_4 = arith.constant 7.87401571E-4 : f32
    %18 = vector.broadcast %cst_3 : f32 to vector<32x128xf32>
    %19 = vector.broadcast %cst_4 : f32 to vector<32x128xf32>
    %20 = arith.select %17, %18, %19 : vector<32x128xi1>, vector<32x128xf32>
    %21 = arith.mulf %20, %10 : vector<32x128xf32>
    %22 = vector.shape_cast %21 : vector<32x128xf32> to vector<1x32x128xf32>
    %cst_5 = arith.constant dense<0.000000e+00> : vector<1xf32>
    %23 = vector.multi_reduction <add>, %22, %cst_5 [1, 2] : vector<1x32x128xf32> to vector<1xf32>
    %24 = vector.shape_cast %23 : vector<1xf32> to vector<1x1x1xf32>
    %25 = vector.extract %24[0, 0, 0] : f32 from vector<1x1x1xf32>
    %cst_6 = arith.constant 0.000000e+00 : f32
    %26 = arith.subf %cst_6, %25 : f32
    %27 = vector.broadcast %26 : f32 to vector<1x8x128xf32>
    %c0_7 = arith.constant 0 : index
    %c0_8 = arith.constant 0 : index
    %c0_9 = arith.constant 0 : index
    %28 = vector.load %arg3[%c0_7, %c0_8, %c0_9] : memref<1x8x128xf32, #tpu.memory_space<vmem>>, vector<1x8x128xf32>
    tpu.vector_store %arg3[%c0_7, %c0_8, %c0_9], %27 {strides = array<i32>} : memref<1x8x128xf32, #tpu.memory_space<vmem>>, vector<1x8x128xf32>,
    return
  }
  func.func @transform_0(%arg0: i32) -> (i32, i32) {
    %c0_i32 = arith.constant 0 : i32
    %c0_i32_0 = arith.constant 0 : i32
    return %arg0, %c0_i32 : i32, i32
  }
  func.func @transform_1(%arg0: i32) -> (i32, i32) {
    %c0_i32 = arith.constant 0 : i32
    %c0_i32_0 = arith.constant 0 : i32
    %c0_i32_1 = arith.constant 0 : i32
    return %c0_i32, %c0_i32_0 : i32, i32
  }
  func.func @transform_2(%arg0: i32) -> (i32, i32, i32) {
    %c0_i32 = arith.constant 0 : i32
    %c0_i32_0 = arith.constant 0 : i32
    %c0_i32_1 = arith.constant 0 : i32
    return %arg0, %c0_i32, %c0_i32_0 : i32, i32, i32
  }
}

</mosaic_0001>

<llo_original>
// kernel: tpu_custom_call.1
$region0: #{tpu_custom_call.1}
  #allocation0 [shape = 'u32[]', space=smem, size = 0x4, offset = 0x4, fixed_abs, tag = 'smem constant byte address 0x4 - core index']
  #allocation1 [shape = 'u32[144,128]{1,0:T(1,128)}', space=vmem, size = 0x12000, scoped, tag = 'internal scratch']
  %s0 = inlined_call_operand.vmem [shape: f32[32,128], index: 0, kind: input, shape index: {}]
  %s1 = inlined_call_operand.vmem [shape: s32[32,1], index: 1, kind: input, shape index: {}]
  %s2 = inlined_call_operand.hbm [shape: f32[1,8,128], index: 2, kind: output, shape index: {}]
  %s3 = sld [smem:[#allocation0]]
  $region18: #{tpu_custom_call.1} parent=0
    _
  %s5 = ssub.s32 1, %s3
  %s6 = scalar_select 0, %s5, %s3
  $region1: #{tpu_custom_call.1} parent=0
    #allocation2 [shape = 'u8[4096]{0}', space=vmem, size = 0x1000, scoped, tag = 'output window, operand 0, single buffered']
    #allocation3 [shape = 's32[1]{0}', space=sflag, size = 0x4, scoped, tag = 'scoped memory for tpu_custom_call.1']
    %7 = vsyncpa [#allocation3], 0
    // Predicated region
    $region2: #{tpu_custom_call.1} parent=1 // pred_check
      _
    $region3: #{tpu_custom_call.1} parent=1 // pred_check_branch
      %9 = sbr.rel (0) target = $region5
    $region4: #{tpu_custom_call.1} parent=1 // pred_region
      _
    $region5: #{tpu_custom_call.1} parent=1 // pred_fallthru
      _
    // Predicated region
    $region6: #{tpu_custom_call.1} parent=1 // pred_check
      _
    $region7: #{tpu_custom_call.1} parent=1 // pred_check_branch
      %11 = sbr.rel (0) target = $region9
    $region8: #{tpu_custom_call.1} parent=1 // pred_region
      _
    $region9: #{tpu_custom_call.1} parent=1 // pred_fallthru
      _
    %v12 = vld [vmem:[%s0] sm:$0xff]
    %v13 = vld [vmem:[%s0 + $0x8] sm:$0xff]
    %v14 = vld [vmem:[%s0 + $0x10] sm:$0xff]
    %v15 = vld [vmem:[%s0 + $0x18] sm:$0xff]
    %16 = vmax.xlane.f32.xlu0 %v12
    %v17 = vpop.xlane.xlu0 %16
    %18 = vmax.xlane.f32.xlu0 %v13
    %v19 = vpop.xlane.xlu0 %18
    %20 = vmax.xlane.f32.xlu0 %v14
    %v21 = vpop.xlane.xlu0 %20
    %22 = vmax.xlane.f32.xlu0 %v15
    %v23 = vpop.xlane.xlu0 %22
    %v24 = vsub.f32 %v12, %v17
    %v25 = vsub.f32 %v13, %v19
    %v26 = vsub.f32 %v14, %v21
    %v27 = vsub.f32 %v15, %v23
    %v28 = vmul.f32 %v24, 1.442695
    %v29 = vpow.pop %v28
    %v30 = vmul.f32 %v25, 1.442695
    %v31 = vpow.pop %v30
    %v32 = vmul.f32 %v26, 1.442695
    %v33 = vpow.pop %v32
    %v34 = vmul.f32 %v27, 1.442695
    %v35 = vpow.pop %v34
    %36 = vadd.xlane.f32.xlu0 %v29
    %v37 = vpop.xlane.xlu0 %36
    %38 = vadd.xlane.f32.xlu0 %v31
    %v39 = vpop.xlane.xlu0 %38
    %40 = vadd.xlane.f32.xlu0 %v33
    %v41 = vpop.xlane.xlu0 %40
    %42 = vadd.xlane.f32.xlu0 %v35
    %v43 = vpop.xlane.xlu0 %42
    %v44 = vlog2.pop %v37
    %v45 = vmul.f32 %v44, 0.6931472
    %v46 = vlog2.pop %v39
    %v47 = vmul.f32 %v46, 0.6931472
    %v48 = vlog2.pop %v41
    %v49 = vmul.f32 %v48, 0.6931472
    %v50 = vlog2.pop %v43
    %v51 = vmul.f32 %v50, 0.6931472
    %v52 = vsub.f32 %v24, %v45
    %v53 = vsub.f32 %v25, %v47
    %v54 = vsub.f32 %v26, %v49
    %v55 = vsub.f32 %v27, %v51
    %s56 = smul.u32 0, 32
    %s57 = scalar_lea.vmem %s1, %s56
    %v58 = vld [vmem:[%s57] sm:$0xff]
    %v59 = vld [vmem:[%s57 + $0x8] sm:$0xff]
    %v60 = vld [vmem:[%s57 + $0x10] sm:$0xff]
    %v61 = vld [vmem:[%s57 + $0x18] sm:$0xff]
    %v62 = vlaneseq
    %v63 = vand.u32 %v62, 127
    %64 = vset.pattern.permute.xlu0 0
    %65 = vperm.xlu0 %64, %v58
    %v66 = vpop.permute.xlu0 %65
    %67 = vset.pattern.permute.xlu0 0
    %68 = vperm.xlu0 %67, %v59
    %v69 = vpop.permute.xlu0 %68
    %70 = vset.pattern.permute.xlu0 0
    %71 = vperm.xlu0 %70, %v60
    %v72 = vpop.permute.xlu0 %71
    %73 = vset.pattern.permute.xlu0 0
    %74 = vperm.xlu0 %73, %v61
    %v75 = vpop.permute.xlu0 %74
    %vm76 = vcmp.eq.s32.totalorder %v63, %v66
    %vm77 = vcmp.eq.s32.totalorder %v63, %v69
    %vm78 = vcmp.eq.s32.totalorder %v63, %v72
    %vm79 = vcmp.eq.s32.totalorder %v63, %v75
    %v80 = vsel %vm76, 0.9, 0.0007874016
    %v81 = vsel %vm77, 0.9, 0.0007874016
    %v82 = vsel %vm78, 0.9, 0.0007874016
    %v83 = vsel %vm79, 0.9, 0.0007874016
    %v84 = vmul.f32 %v80, %v52
    %v85 = vmul.f32 %v81, %v53
    %v86 = vmul.f32 %v82, %v54
    %v87 = vmul.f32 %v83, %v55
    %v88 = vadd.f32 %v84, %v85
    %v89 = vadd.f32 %v88, %v86
    %v90 = vadd.f32 %v89, %v87
    %91 = vadd.xlane.f32.xlu0 %v90
    %v92 = vpop.xlane.xlu0 %91
    %v93 = vrot.slane %v92, 4
    %v94 = vadd.f32 %v92, %v93
    %v95 = vrot.slane %v94, 2
    %v96 = vadd.f32 %v94, %v95
    %v97 = vrot.slane %v96, 1
    %v98 = vadd.f32 %v96, %v97
    %s99 = vtos %v98
    %s100 = ssub.f32 0.0, %s99
    %v101 = vstv %s100
    %102 = vst [vmem:[#allocation2] sm:$0xff] %v101
    // Predicated region
    $region10: #{tpu_custom_call.1} parent=1 // pred_check
      _
    $region11: #{tpu_custom_call.1} parent=1 // pred_check_branch
      %104 = sbr.rel (0) target = $region13
    $region12: #{tpu_custom_call.1} parent=1 // pred_region
      %s106 = ssub.s32 128, 128
      %107 = vsyncadd [#allocation3], %s106
      %s109 = sshll.u32 [#allocation2], 4
      %s110 = int_to_ptr.vmem [resolvable:$true] %s109
      %112 = dma.vmem_to_hbm [thread:$0]  %s110, 128, %s2, [#allocation3]
    $region13: #{tpu_custom_call.1} parent=1 // pred_fallthru
      _
    // Predicated region
    $region14: #{tpu_custom_call.1} parent=1 // pred_check
      _
    $region15: #{tpu_custom_call.1} parent=1 // pred_check_branch
      %114 = sbr.rel (0) target = $region17
    $region16: #{tpu_custom_call.1} parent=1 // pred_region
      %115 = dma.done [#allocation3], 128
    $region17: #{tpu_custom_call.1} parent=1 // pred_fallthru
      _
    %116 = vsyncpa [#allocation3], 1

</llo_original>
